<compile_context>
chip_gen: v5e
topology: v5e:2x2
jax: 0.10.0
libtpu: 0.0.40
codegen_flags: <defaults>
</compile_context>

<pallas_src>
import functools
import math

import jax
import jax.numpy as jnp
from jax.experimental import pallas as pl
from jax.experimental.pallas import tpu as pltpu


# -----------------------------------------------------------------------------
# Buffer construction (identical to PositionalEncoding.__init__)
# -----------------------------------------------------------------------------
def make_positional_encoding_table(d_model, max_len=5000, dtype=jnp.float32):
    position = jnp.arange(0, max_len, dtype=jnp.float32)[:, None]            # (L, 1)
    div_term = jnp.exp(
        jnp.arange(0, d_model, 2, dtype=jnp.float32) * (-math.log(10000.0) / d_model)
    )                                                                         # (D/2,)
    pe = jnp.zeros((max_len, d_model), dtype=jnp.float32)
    pe = pe.at[:, 0::2].set(jnp.sin(position * div_term))
    pe = pe.at[:, 1::2].set(jnp.cos(position * div_term))
    # unsqueeze(0).transpose(0, 1) -> (max_len, 1, d_model)
    return pe[:, None, :].astype(dtype)


# -----------------------------------------------------------------------------
# Kernel: fused broadcast add + inverted dropout on 3-D blocks
#   x_ref/bits_ref/o_ref : (s_tile, B, D)      pe_ref : (s_tile, 1, D)
# -----------------------------------------------------------------------------
def _pe_add_dropout_kernel(x_ref, pe_ref, bits_ref, o_ref, *, keep_threshold, scale):
    out = x_ref[...] + pe_ref[...]                 # sublane broadcast over batch
    thr = jnp.asarray(keep_threshold, dtype=jnp.uint32)
    keep = bits_ref[...] >= thr                    # P(keep) = 1 - p
    scale_c = jnp.asarray(scale, out.dtype)        # cast once, stay in out.dtype
    zero = jnp.zeros((), dtype=out.dtype)
    out = jnp.where(keep, out * scale_c, zero)
    o_ref[...] = out.astype(o_ref.dtype)


# -----------------------------------------------------------------------------
# Tiling helpers
# -----------------------------------------------------------------------------
def _default_step_bytes():
    """Target total working set (all streams, single-buffered) per grid step."""
    try:
        vmem = pltpu.get_tpu_info().vmem_capacity_bytes
    except Exception:
        return 6 << 20                      # unknown backend (e.g. interpret)
    if vmem <= 80 * 1024 * 1024:            # v7x-class: 64 MiB physical VMEM,
        return 18 << 20                     # 3.2 TB/s -> bigger tiles amortize
    return 12 << 20                         # v5e / v6e: 128 MiB physical VMEM


def _choose_s_tile(S, row_bytes, sublane, target_step_bytes):
    """Rows per grid step.  Rounded to the dtype sublane multiple, capped so the
    grid keeps >=2 steps (v7x megacore) when the sequence is long enough."""
    rows = max(1, target_step_bytes // max(row_bytes, 1))
    if rows < S and rows > sublane:
        rows = (rows // sublane) * sublane
    rows = min(rows, S)
    if S > 2 * sublane:
        cap = -(-S // 2)                                  # cdiv(S, 2)
        cap = ((cap + sublane - 1) // sublane) * sublane
        rows = min(rows, cap)
    return max(1, rows)


# -----------------------------------------------------------------------------
# Wrapper: PositionalEncoding.forward  ->  dropout(x + pe[:S])
# -----------------------------------------------------------------------------
def positional_encoding_forward(x, pe_table, *, dropout_p=0.1, training=False,
                                rng_key=None, block_bytes_target=None):
    """x: (S, B, D);  pe_table: (max_len, 1, D);  returns (S, B, D)."""
    S, B, D = x.shape
    pe = pe_table[:S].astype(x.dtype)                     # (S, 1, D)

    use_dropout = bool(training) and dropout_p > 0.0
    if not use_dropout:
        # Pure broadcast add: XLA already fuses this at HBM roofline; a Pallas
        # kernel here only adds launch overhead (per perf review).
        return x + pe

    if dropout_p >= 1.0:
        # nn.Dropout(p=1.0) zeroes everything in training mode.
        return jnp.zeros_like(x)

    if rng_key is None:
        rng_key = jax.random.PRNGKey(0)
    bits = jax.random.bits(rng_key, (S, B, D), dtype=jnp.uint32)

    itemsize = jnp.dtype(x.dtype).itemsize
    sublane = {4: 8, 2: 16, 1: 32}.get(itemsize, 8)
    # Per-sequence-row bytes across all streams: x read + out write + bits read + pe read.
    row_bytes = B * D * (2 * itemsize + 4) + D * itemsize
    if block_bytes_target is None:
        block_bytes_target = _default_step_bytes()
    s_tile = _choose_s_tile(S, row_bytes, sublane, block_bytes_target)
    grid = (pl.cdiv(S, s_tile),)

    step_bytes = s_tile * row_bytes
    # Double-buffered working set + headroom; <= v7x's 64 MiB physical VMEM.
    vmem_limit = int(min(max(2 * step_bytes + (4 << 20), 16 << 20), 60 << 20))

    keep_threshold = min(int(round(dropout_p * (1 << 32))), (1 << 32) - 1)
    kernel = functools.partial(
        _pe_add_dropout_kernel,
        keep_threshold=keep_threshold,
        scale=1.0 / (1.0 - dropout_p),
    )

    cost = pl.CostEstimate(
        flops=2 * S * B * D,
        transcendentals=0,
        bytes_accessed=(2 * itemsize + 4) * S * B * D + itemsize * S * D,
    )

    out = pl.pallas_call(
        kernel,
        out_shape=jax.ShapeDtypeStruct((S, B, D), x.dtype),
        grid=grid,
        in_specs=[
            pl.BlockSpec((s_tile, B, D), lambda i: (i, 0, 0)),   # x
            pl.BlockSpec((s_tile, 1, D), lambda i: (i, 0, 0)),   # pe (batch-broadcast in kernel)
            pl.BlockSpec((s_tile, B, D), lambda i: (i, 0, 0)),   # random bits
        ],
        out_specs=pl.BlockSpec((s_tile, B, D), lambda i: (i, 0, 0)),
        compiler_params=pltpu.CompilerParams(
            dimension_semantics=("parallel",),   # tiles independent -> v7x 2-TC sharding
            vmem_limit_bytes=vmem_limit,
        ),
        cost_estimate=cost,
    )(x, pe, bits)
    return out


# -----------------------------------------------------------------------------
# Self-test
# -----------------------------------------------------------------------------
if __name__ == "__main__":
    # Small shapes consistent with the module: seq=8, batch=2, d_model=32.
    S, B, D = 8, 2, 32
    max_len = 128

    key = jax.random.PRNGKey(0)
    kx, kx2 = jax.random.split(key)
    x = jax.random.normal(kx, (S, B, D), dtype=jnp.float32)
    pe_table = make_positional_encoding_table(D, max_len=max_len)
    ref_add = x + pe_table[:S]

    # --- eval path (nn.Dropout is identity in eval mode) --------------------
    out_eval = positional_encoding_forward(x, pe_table, dropout_p=0.1, training=False)
    out_eval = jax.block_until_ready(out_eval)
    assert out_eval.shape == (S, B, D)
    assert jnp.allclose(out_eval, ref_add, atol=1e-6), "eval-mode mismatch"

    # --- training path: fused add + inverted dropout (deterministic given key)
    p = 0.1
    scale = 1.0 / (1.0 - p)
    thr = jnp.asarray(min(int(round(p * (1 << 32))), (1 << 32) - 1), dtype=jnp.uint32)
    rng = jax.random.PRNGKey(1234)

    out_tr = positional_encoding_forward(x, pe_table, dropout_p=p, training=True,
                                         rng_key=rng)
    out_tr = jax.block_until_ready(out_tr)
    bits_ref = jax.random.bits(rng, (S, B, D), dtype=jnp.uint32)
    ref_tr = jnp.where(bits_ref >= thr, ref_add * scale, 0.0).astype(x.dtype)
    assert jnp.allclose(out_tr, ref_tr, rtol=1e-6, atol=1e-6), "dropout mismatch"

    # --- multi-step grid (tiny block target forces tiling + pipelining) -----
    S2 = 64
    x2 = jax.random.normal(kx2, (S2, B, D), dtype=jnp.float32)
    out2 = positional_encoding_forward(x2, pe_table, dropout_p=p, training=True,
                                       rng_key=rng, block_bytes_target=4096)
    out2 = jax.block_until_ready(out2)
    bits2 = jax.random.bits(rng, (S2, B, D), dtype=jnp.uint32)
    ref2 = jnp.where(bits2 >= thr, (x2 + pe_table[:S2]) * scale, 0.0).astype(x2.dtype)
    assert jnp.allclose(out2, ref2, rtol=1e-6, atol=1e-6), "tiled dropout mismatch"

    print("KERNEL_OK")
</pallas_src>

<mosaic_0001>
module attributes {stable_mosaic.version = 11 : i64} {
  func.func @_pe_add_dropout_kernel(%arg0: i32, %arg1: memref<8x2x32xf32, #tpu.memory_space<vmem>>, %arg2: memref<8x1x32xf32, #tpu.memory_space<vmem>>, %arg3: memref<8x2x32xi32, #tpu.memory_space<vmem>>, %arg4: memref<8x2x32xf32, #tpu.memory_space<vmem>>) attributes {dimension_semantics = [#tpu.dimension_semantics<parallel>], iteration_bounds = array<i64: 1>, scalar_prefetch = 0 : i64, scratch_operands = 0 : i64, tpu.core_type = #tpu.core_type<tc>, window_params = [{transform_indices = @transform_0, window_bounds = array<i64: 8, 2, 32>}, {transform_indices = @transform_1, window_bounds = array<i64: 8, 1, 32>}, {transform_indices = @transform_2, window_bounds = array<i64: 8, 2, 32>}, {transform_indices = @transform_3, window_bounds = array<i64: 8, 2, 32>}]} {
    %c0 = arith.constant 0 : index
    %c0_0 = arith.constant 0 : index
    %c0_1 = arith.constant 0 : index
    %0 = vector.load %arg1[%c0, %c0_0, %c0_1] : memref<8x2x32xf32, #tpu.memory_space<vmem>>, vector<8x2x32xf32>
    %c0_2 = arith.constant 0 : index
    %c0_3 = arith.constant 0 : index
    %c0_4 = arith.constant 0 : index
    %1 = vector.load %arg2[%c0_2, %c0_3, %c0_4] : memref<8x1x32xf32, #tpu.memory_space<vmem>>, vector<8x1x32xf32>
    %2 = vector.broadcast %1 : vector<8x1x32xf32> to vector<8x2x32xf32>
    %3 = arith.addf %0, %2 : vector<8x2x32xf32>
    %c0_5 = arith.constant 0 : index
    %c0_6 = arith.constant 0 : index
    %c0_7 = arith.constant 0 : index
    %4 = vector.load %arg3[%c0_5, %c0_6, %c0_7] : memref<8x2x32xi32, #tpu.memory_space<vmem>>, vector<8x2x32xi32>
    %c429496730_i32 = arith.constant 429496730 : i32
    %5 = vector.broadcast %c429496730_i32 : i32 to vector<8x2x32xi32>
    %6 = arith.cmpi uge, %4, %5 : vector<8x2x32xi32>
    %cst = arith.constant 1.11111116 : f32
    %7 = vector.broadcast %cst : f32 to vector<8x2x32xf32>
    %8 = arith.mulf %3, %7 : vector<8x2x32xf32>
    %cst_8 = arith.constant 0.000000e+00 : f32
    %9 = vector.broadcast %cst_8 : f32 to vector<8x2x32xf32>
    %10 = arith.select %6, %8, %9 : vector<8x2x32xi1>, vector<8x2x32xf32>
    %c0_9 = arith.constant 0 : index
    %c0_10 = arith.constant 0 : index
    %c0_11 = arith.constant 0 : index
    %11 = vector.load %arg4[%c0_9, %c0_10, %c0_11] : memref<8x2x32xf32, #tpu.memory_space<vmem>>, vector<8x2x32xf32>
    tpu.vector_store %arg4[%c0_9, %c0_10, %c0_11], %10 {strides = array<i32>} : memref<8x2x32xf32, #tpu.memory_space<vmem>>, vector<8x2x32xf32>,
    return
  }
  func.func @transform_0(%arg0: i32) -> (i32, i32, i32) {
    %c0_i32 = arith.constant 0 : i32
    %c0_i32_0 = arith.constant 0 : i32
    %c0_i32_1 = arith.constant 0 : i32
    return %arg0, %c0_i32, %c0_i32_0 : i32, i32, i32
  }
  func.func @transform_1(%arg0: i32) -> (i32, i32, i32) {
    %c0_i32 = arith.constant 0 : i32
    %c0_i32_0 = arith.constant 0 : i32
    %c0_i32_1 = arith.constant 0 : i32
    return %arg0, %c0_i32, %c0_i32_0 : i32, i32, i32
  }
  func.func @transform_2(%arg0: i32) -> (i32, i32, i32) {
    %c0_i32 = arith.constant 0 : i32
    %c0_i32_0 = arith.constant 0 : i32
    %c0_i32_1 = arith.constant 0 : i32
    return %arg0, %c0_i32, %c0_i32_0 : i32, i32, i32
  }
  func.func @transform_3(%arg0: i32) -> (i32, i32, i32) {
    %c0_i32 = arith.constant 0 : i32
    %c0_i32_0 = arith.constant 0 : i32
    %c0_i32_1 = arith.constant 0 : i32
    return %arg0, %c0_i32, %c0_i32_0 : i32, i32, i32
  }
}

</mosaic_0001>

<llo_original>
// kernel: tpu_custom_call.1
$region0: #{tpu_custom_call.1}
  #allocation0 [shape = 'u32[]', space=smem, size = 0x4, offset = 0x4, fixed_abs, tag = 'smem constant byte address 0x4 - core index']
  #allocation1 [shape = 'u32[72,128]{1,0:T(1,128)}', space=vmem, size = 0x9000, scoped, tag = 'internal scratch']
  %s0 = inlined_call_operand.hbm [shape: f32[8,2,32], index: 0, kind: input, shape index: {}]
  %s1 = inlined_call_operand.hbm [shape: f32[8,1,32], index: 1, kind: input, shape index: {}]
  %s2 = inlined_call_operand.hbm [shape: u32[8,2,32], index: 2, kind: input, shape index: {}]
  %s3 = inlined_call_operand.hbm [shape: f32[8,2,32], index: 3, kind: output, shape index: {}]
  %s4 = sld [smem:[#allocation0]]
  $region34: #{tpu_custom_call.1} parent=0
    _
  %s6 = ssub.s32 1, %s4
  %s7 = scalar_select 0, %s6, %s4
  $region1: #{tpu_custom_call.1} parent=0
    #allocation2 [shape = 'u8[8192]{0}', space=vmem, size = 0x2000, scoped, tag = 'input window, operand 0, single buffered']
    #allocation3 [shape = 's32[1]{0}', space=sflag, size = 0x4, scoped, tag = 'scoped memory for tpu_custom_call.1']
    #allocation4 [shape = 's32[1]{0}', space=sflag, size = 0x4, scoped, tag = 'scoped memory for tpu_custom_call.1']
    #allocation5 [shape = 'u8[4096]{0}', space=vmem, size = 0x1000, scoped, tag = 'input window, operand 1, single buffered']
    #allocation6 [shape = 's32[1]{0}', space=sflag, size = 0x4, scoped, tag = 'scoped memory for tpu_custom_call.1']
    #allocation7 [shape = 'u8[8192]{0}', space=vmem, size = 0x2000, scoped, tag = 'input window, operand 2, single buffered']
    #allocation8 [shape = 'u8[8192]{0}', space=vmem, size = 0x2000, scoped, tag = 'output window, operand 0, single buffered']
    %8 = vsyncpa [#allocation3], 0
    %9 = vsyncpa [#allocation6], 0
    %10 = vsyncpa [#allocation4], 0
    // Predicated region
    $region2: #{tpu_custom_call.1} parent=1 // pred_check
      _
    $region3: #{tpu_custom_call.1} parent=1 // pred_check_branch
      %12 = sbr.rel (0) target = $region5
    $region4: #{tpu_custom_call.1} parent=1 // pred_region
      %14 = vsyncadd [#allocation3], 0
      %s15 = sshll.u32 %s0, 4
      %s16 = int_to_ptr.hbm [resolvable:$true] %s15
      %s17 = sshll.u32 [#allocation2], 4
      %s18 = int_to_ptr.vmem [resolvable:$true] %s17
      %23 = dma.hbm_to_vmem [thread:$0]  %s16, 256, %s18, [#allocation3], 32, 32, 2
    $region5: #{tpu_custom_call.1} parent=1 // pred_fallthru
      _
    // Predicated region
    $region6: #{tpu_custom_call.1} parent=1 // pred_check
      _
    $region7: #{tpu_custom_call.1} parent=1 // pred_check_branch
      %25 = sbr.rel (0) target = $region9
    $region8: #{tpu_custom_call.1} parent=1 // pred_region
      %27 = vsyncadd [#allocation6], 0
      %s28 = sshll.u32 %s1, 4
      %s29 = int_to_ptr.hbm [resolvable:$true] %s28
      %s30 = sshll.u32 [#allocation5], 4
      %s31 = int_to_ptr.vmem [resolvable:$true] %s30
      %36 = dma.hbm_to_vmem [thread:$0]  %s29, 128, %s31, [#allocation6], 16, 16, 1
    $region9: #{tpu_custom_call.1} parent=1 // pred_fallthru
      _
    // Predicated region
    $region10: #{tpu_custom_call.1} parent=1 // pred_check
      _
    $region11: #{tpu_custom_call.1} parent=1 // pred_check_branch
      %38 = sbr.rel (0) target = $region13
    $region12: #{tpu_custom_call.1} parent=1 // pred_region
      %40 = vsyncadd [#allocation6], 0
      %s41 = sshll.u32 %s2, 4
      %s42 = int_to_ptr.hbm [resolvable:$true] %s41
      %s43 = sshll.u32 [#allocation7], 4
      %s44 = int_to_ptr.vmem [resolvable:$true] %s43
      %49 = dma.hbm_to_vmem [thread:$0]  %s42, 256, %s44, [#allocation6], 32, 32, 2
    $region13: #{tpu_custom_call.1} parent=1 // pred_fallthru
      _
    // Predicated region
    $region14: #{tpu_custom_call.1} parent=1 // pred_check
      _
    $region15: #{tpu_custom_call.1} parent=1 // pred_check_branch
      %51 = sbr.rel (0) target = $region17
    $region16: #{tpu_custom_call.1} parent=1 // pred_region
      %53 = dma.done [#allocation3], 256
    $region17: #{tpu_custom_call.1} parent=1 // pred_fallthru
      _
    // Predicated region
    $region18: #{tpu_custom_call.1} parent=1 // pred_check
      _
    $region19: #{tpu_custom_call.1} parent=1 // pred_check_branch
      %55 = sbr.rel (0) target = $region21
    $region20: #{tpu_custom_call.1} parent=1 // pred_region
      %57 = dma.done [#allocation6], 128
    $region21: #{tpu_custom_call.1} parent=1 // pred_fallthru
      _
    // Predicated region
    $region22: #{tpu_custom_call.1} parent=1 // pred_check
      _
    $region23: #{tpu_custom_call.1} parent=1 // pred_check_branch
      %59 = sbr.rel (0) target = $region25
    $region24: #{tpu_custom_call.1} parent=1 // pred_region
      %61 = dma.done [#allocation6], 256
    $region25: #{tpu_custom_call.1} parent=1 // pred_fallthru
      _
    %v62 = vld [vmem:[#allocation2] sm:$0x3]
    %v63 = vld [vmem:[#allocation2 + $0x2] sm:$0x3]
    %v64 = vld [vmem:[#allocation2 + $0x4] sm:$0x3]
    %v65 = vld [vmem:[#allocation2 + $0x6] sm:$0x3]
    %v66 = vld [vmem:[#allocation2 + $0x8] sm:$0x3]
    %v67 = vld [vmem:[#allocation2 + $0xa] sm:$0x3]
    %v68 = vld [vmem:[#allocation2 + $0xc] sm:$0x3]
    %v69 = vld [vmem:[#allocation2 + $0xe] sm:$0x3]
    %v70 = vld [vmem:[#allocation5] sm:$0x1]
    %v71 = vld [vmem:[#allocation5 + $0x1] sm:$0x1]
    %v72 = vld [vmem:[#allocation5 + $0x2] sm:$0x1]
    %v73 = vld [vmem:[#allocation5 + $0x3] sm:$0x1]
    %v74 = vld [vmem:[#allocation5 + $0x4] sm:$0x1]
    %v75 = vld [vmem:[#allocation5 + $0x5] sm:$0x1]
    %v76 = vld [vmem:[#allocation5 + $0x6] sm:$0x1]
    %v77 = vld [vmem:[#allocation5 + $0x7] sm:$0x1]
    %v86 = vperm.slane %v70, 0
    %v87 = vperm.slane %v71, 0
    %v88 = vperm.slane %v72, 0
    %v89 = vperm.slane %v73, 0
    %v90 = vperm.slane %v74, 0
    %v91 = vperm.slane %v75, 0
    %v92 = vperm.slane %v76, 0
    %v93 = vperm.slane %v77, 0
    %v102 = vadd.f32 %v62, %v86
    %v103 = vadd.f32 %v63, %v87
    %v104 = vadd.f32 %v64, %v88
    %v105 = vadd.f32 %v65, %v89
    %v106 = vadd.f32 %v66, %v90
    %v107 = vadd.f32 %v67, %v91
    %v108 = vadd.f32 %v68, %v92
    %v109 = vadd.f32 %v69, %v93
    %v110 = vld [vmem:[#allocation7] sm:$0x3]
    %v111 = vld [vmem:[#allocation7 + $0x2] sm:$0x3]
    %v112 = vld [vmem:[#allocation7 + $0x4] sm:$0x3]
    %v113 = vld [vmem:[#allocation7 + $0x6] sm:$0x3]
    %v114 = vld [vmem:[#allocation7 + $0x8] sm:$0x3]
    %v115 = vld [vmem:[#allocation7 + $0xa] sm:$0x3]
    %v116 = vld [vmem:[#allocation7 + $0xc] sm:$0x3]
    %v117 = vld [vmem:[#allocation7 + $0xe] sm:$0x3]
    %v118 = vadd.s32 %v110, 2147483648
    %vm120 = vcmp.ge.s32.totalorder %v118, 2576980378
    %v121 = vadd.s32 %v111, 2147483648
    %vm123 = vcmp.ge.s32.totalorder %v121, 2576980378
    %v124 = vadd.s32 %v112, 2147483648
    %vm126 = vcmp.ge.s32.totalorder %v124, 2576980378
    %v127 = vadd.s32 %v113, 2147483648
    %vm129 = vcmp.ge.s32.totalorder %v127, 2576980378
    %v130 = vadd.s32 %v114, 2147483648
    %vm132 = vcmp.ge.s32.totalorder %v130, 2576980378
    %v133 = vadd.s32 %v115, 2147483648
    %vm135 = vcmp.ge.s32.totalorder %v133, 2576980378
    %v136 = vadd.s32 %v116, 2147483648
    %vm138 = vcmp.ge.s32.totalorder %v136, 2576980378
    %v139 = vadd.s32 %v117, 2147483648
    %vm141 = vcmp.ge.s32.totalorder %v139, 2576980378
    %v142 = vmul.f32 %v102, 1.1111112
    %v143 = vmul.f32 %v103, 1.1111112
    %v144 = vmul.f32 %v104, 1.1111112
    %v145 = vmul.f32 %v105, 1.1111112
    %v146 = vmul.f32 %v106, 1.1111112
    %v147 = vmul.f32 %v107, 1.1111112
    %v148 = vmul.f32 %v108, 1.1111112
    %v149 = vmul.f32 %v109, 1.1111112
    %v150 = vsel %vm120, %v142, 0.0
    %v151 = vsel %vm123, %v143, 0.0
    %v152 = vsel %vm126, %v144, 0.0
    %v153 = vsel %vm129, %v145, 0.0
    %v154 = vsel %vm132, %v146, 0.0
    %v155 = vsel %vm135, %v147, 0.0
    %v156 = vsel %vm138, %v148, 0.0
    %v157 = vsel %vm141, %v149, 0.0
    %vm158 = vcmask 254976
    %159 = vst.msk [vmem:[#allocation8] sm:$0x3] %vm158, %v150
    %160 = vst.msk [vmem:[#allocation8 + $0x2] sm:$0x3] %vm158, %v151
    %161 = vst.msk [vmem:[#allocation8 + $0x4] sm:$0x3] %vm158, %v152
    %162 = vst.msk [vmem:[#allocation8 + $0x6] sm:$0x3] %vm158, %v153
    %163 = vst.msk [vmem:[#allocation8 + $0x8] sm:$0x3] %vm158, %v154
    %164 = vst.msk [vmem:[#allocation8 + $0xa] sm:$0x3] %vm158, %v155
    %165 = vst.msk [vmem:[#allocation8 + $0xc] sm:$0x3] %vm158, %v156
    %166 = vst.msk [vmem:[#allocation8 + $0xe] sm:$0x3] %vm158, %v157
    // Predicated region
    $region26: #{tpu_custom_call.1} parent=1 // pred_check
      _
    $region27: #{tpu_custom_call.1} parent=1 // pred_check_branch
      %168 = sbr.rel (0) target = $region29
    $region28: #{tpu_custom_call.1} parent=1 // pred_region
      %170 = vsyncadd [#allocation4], 0
      %s171 = sshll.u32 [#allocation8], 4
      %s172 = int_to_ptr.vmem [resolvable:$true] %s171
      %s173 = sshll.u32 %s3, 4
      %s174 = int_to_ptr.hbm [resolvable:$true] %s173
      %179 = dma.vmem_to_hbm [thread:$0]  %s172, 256, %s174, [#allocation4], 32, 32, 2
    $region29: #{tpu_custom_call.1} parent=1 // pred_fallthru
      _
    // Predicated region
    $region30: #{tpu_custom_call.1} parent=1 // pred_check
      _
    $region31: #{tpu_custom_call.1} parent=1 // pred_check_branch
      %181 = sbr.rel (0) target = $region33
    $region32: #{tpu_custom_call.1} parent=1 // pred_region
      %183 = dma.done [#allocation4], 256
    $region33: #{tpu_custom_call.1} parent=1 // pred_fallthru
      _
    %184 = vsyncpa [#allocation3], 1
    %185 = vsyncpa [#allocation6], 1
    %186 = vsyncpa [#allocation4], 1

</llo_original>
